<compile_context>
chip_gen: v6e
topology: v6e:2x2x1
jax: 0.10.0
libtpu: 0.0.40
codegen_flags: <defaults>
</compile_context>

<pallas_src>
import jax
import jax.numpy as jnp
from jax import lax
from jax.experimental import pallas as pl
from jax.experimental.pallas import tpu as pltpu


def _round_up(x, m):
    return ((x + m - 1) // m) * m


def decoder_kernel(z_ref, wfc_ref, bfc_ref, wih_ref, bih_ref, whh_ref, bhh_ref,
                   out_ref, h_scratch, xwb_scratch):
    # First time-chunk of each batch block: compute the loop-invariant input
    # projection once (fc -> W_ih, with both RNN biases folded in) and reset h.
    @pl.when(pl.program_id(1) == 0)
    def _init():
        x = jnp.dot(z_ref[...].astype(wfc_ref.dtype), wfc_ref[...],
                    preferred_element_type=jnp.float32) + bfc_ref[...]
        xwb_scratch[...] = (jnp.dot(x.astype(wih_ref.dtype), wih_ref[...],
                                    preferred_element_type=jnp.float32)
                            + bih_ref[...] + bhh_ref[...])
        h_scratch[...] = jnp.zeros_like(h_scratch)

    # Hoist every loop-invariant VMEM read out of the recurrence.
    whh = whh_ref[...]
    xwb = xwb_scratch[...]
    t_chunk = out_ref.shape[0]

    def step(t, h):
        h = jnp.tanh(xwb + jnp.dot(h.astype(whh.dtype), whh,
                                   preferred_element_type=jnp.float32))
        # Time-major output block: one leading index = a dense (Bt, Op) store
        # (lane-dense, no sublane masking).
        out_ref[t] = h.astype(out_ref.dtype)
        return h

    h = h_scratch[...]            # carried in vregs within the chunk
    if t_chunk <= 32:
        for t in range(t_chunk):  # fully unrolled: static indices, LLO sees across steps
            h = step(t, h)
    else:
        # Bounded unroll keeps vreg pressure / code size in check at big chunks.
        h = lax.fori_loop(0, t_chunk, step, h, unroll=8)

    h_scratch[...] = h            # carry hidden state into the next time-chunk


def decoder_forward(z, seq_len, params, *, t_chunk=64, mxu_dtype=jnp.float32,
                    vmem_out_budget=8 * 1024 * 1024):
    """params = (wfc_T (L,H), bfc (1,H), wih_T (H,O), bih (1,O), whh_T (O,O), bhh (1,O))."""
    wfc_T, bfc, wih_T, bih, whh_T, bhh = params
    B, L = z.shape
    H = wfc_T.shape[1]
    O = whh_T.shape[0]

    # ---- TPU-aligned padded sizes (sublane=8, lane=128) --------------------
    Lp = _round_up(L, 128)
    Hp = _round_up(H, 128)
    Op = _round_up(O, 128)

    Bp8 = _round_up(B, 8)
    if B >= 16:
        # >=2 batch blocks so the "parallel" axis gives v7x's second TC work,
        # capped at 256 rows (v6e/v7x MXU height) per block.
        Bt = min(_round_up(-(-Bp8 // 2), 8), 256)
    else:
        Bt = Bp8                  # single block: stream all rows every step
    Bp = _round_up(Bp8, Bt)

    # Large time-chunks amortize per-grid-step overhead; cap so the
    # double-buffered time-major output block stays within a few MiB
    # (v7x: 64 MiB VMEM / 32 MiB scoped default).
    t_chunk = _round_up(max(8, min(t_chunk, _round_up(seq_len, 8))), 8)
    max_tc = max(8, ((vmem_out_budget // (2 * Bt * Op * 4)) // 8) * 8)
    t_chunk = min(t_chunk, max_tc)
    Tp = _round_up(seq_len, t_chunk)

    pad2 = lambda a, r, c, d: jnp.pad(
        a.astype(d), ((0, r - a.shape[0]), (0, c - a.shape[1])))

    z_p = pad2(z, Bp, Lp, jnp.float32)
    wfc_p = pad2(wfc_T, Lp, Hp, mxu_dtype)
    bfc_p = pad2(bfc, 1, Hp, jnp.float32)
    wih_p = pad2(wih_T, Hp, Op, mxu_dtype)
    bih_p = pad2(bih, 1, Op, jnp.float32)
    whh_p = pad2(whh_T, Op, Op, mxu_dtype)
    bhh_p = pad2(bhh, 1, Op, jnp.float32)

    grid = (Bp // Bt, Tp // t_chunk)

    out_tm = pl.pallas_call(
        decoder_kernel,
        out_shape=jax.ShapeDtypeStruct((Tp, Bp, Op), jnp.float32),
        grid=grid,
        in_specs=[
            pl.BlockSpec((Bt, Lp), lambda b, t: (b, 0)),   # z (per batch block)
            pl.BlockSpec((Lp, Hp), lambda b, t: (0, 0)),   # W_fc^T
            pl.BlockSpec((1, Hp), lambda b, t: (0, 0)),    # b_fc
            pl.BlockSpec((Hp, Op), lambda b, t: (0, 0)),   # W_ih^T
            pl.BlockSpec((1, Op), lambda b, t: (0, 0)),    # b_ih
            pl.BlockSpec((Op, Op), lambda b, t: (0, 0)),   # W_hh^T
            pl.BlockSpec((1, Op), lambda b, t: (0, 0)),    # b_hh
        ],
        # Time-major output, streamed per time-chunk: dense (Bt, Op) stores in
        # the kernel, and the full (T, B, O) buffer is never VMEM-resident.
        out_specs=pl.BlockSpec((t_chunk, Bt, Op), lambda b, t: (t, b, 0)),
        scratch_shapes=[
            pltpu.VMEM((Bt, Op), jnp.float32),   # h carried across time-chunks
            pltpu.VMEM((Bt, Op), jnp.float32),   # loop-invariant xW_ih + b_ih + b_hh
        ],
        compiler_params=pltpu.CompilerParams(
            dimension_semantics=("parallel", "arbitrary")),
    )(z_p, wfc_p, bfc_p, wih_p, bih_p, whh_p, bhh_p)

    # Slice off padding and return in PyTorch (B, T, O) layout.
    return jnp.transpose(out_tm[:seq_len, :B, :O], (1, 0, 2))


def decoder_reference(z, seq_len, params):
    """Pure-JAX reference matching torch semantics exactly."""
    wfc_T, bfc, wih_T, bih, whh_T, bhh = params
    x = z @ wfc_T + bfc
    h = jnp.zeros((z.shape[0], whh_T.shape[0]), jnp.float32)
    outs = []
    for _ in range(seq_len):
        h = jnp.tanh(x @ wih_T + bih + h @ whh_T + bhh)
        outs.append(h)
    return jnp.stack(outs, axis=1)


def init_params(key, latent_size, hidden_size, output_size):
    """Deterministic synthetic parameters with the nn.Module's shapes.

    PyTorch stores: fc.weight (H,L), fc.bias (H,), rnn.weight_ih_l0 (O,H),
    rnn.weight_hh_l0 (O,O), rnn.bias_ih_l0 (O,), rnn.bias_hh_l0 (O,).
    Weights are passed pre-transposed so the kernel does x @ W.
    """
    ks = jax.random.split(key, 6)
    u = lambda k, shape, scale: jax.random.uniform(
        k, shape, jnp.float32, minval=-scale, maxval=scale)
    wfc = u(ks[0], (hidden_size, latent_size), 1.0 / jnp.sqrt(latent_size))
    bfc = u(ks[1], (hidden_size,), 1.0 / jnp.sqrt(latent_size))
    wih = u(ks[2], (output_size, hidden_size), 1.0 / jnp.sqrt(output_size))
    whh = u(ks[3], (output_size, output_size), 1.0 / jnp.sqrt(output_size))
    bih = u(ks[4], (output_size,), 1.0 / jnp.sqrt(output_size))
    bhh = u(ks[5], (output_size,), 1.0 / jnp.sqrt(output_size))
    return (wfc.T, bfc.reshape(1, -1),
            wih.T, bih.reshape(1, -1),
            whh.T, bhh.reshape(1, -1))


if __name__ == "__main__":
    latent_size = 2
    hidden_size = 10
    output_size = 8

    key = jax.random.PRNGKey(0)
    k_param, k_z1, k_z2 = jax.random.split(key, 3)
    params = init_params(k_param, latent_size, hidden_size, output_size)

    # Test 1: module-sized shapes, single time-chunk / single batch block.
    batch, seq_len = 4, 6
    z = jax.random.normal(k_z1, (batch, latent_size), jnp.float32)
    out = jax.block_until_ready(decoder_forward(z, seq_len, params))
    ref = decoder_reference(z, seq_len, params)
    assert out.shape == (batch, seq_len, output_size), out.shape
    assert jnp.allclose(out, ref, rtol=1e-3, atol=1e-3), float(
        jnp.max(jnp.abs(out - ref)))

    # Test 2: multiple batch blocks and multiple time-chunks (exercises the
    # hidden-state carry across chunks and the per-block scratch re-init).
    batch2, seq_len2 = 20, 20
    z2 = jax.random.normal(k_z2, (batch2, latent_size), jnp.float32)
    out2 = jax.block_until_ready(decoder_forward(z2, seq_len2, params, t_chunk=8))
    ref2 = decoder_reference(z2, seq_len2, params)
    assert out2.shape == (batch2, seq_len2, output_size), out2.shape
    assert jnp.allclose(out2, ref2, rtol=1e-3, atol=1e-3), float(
        jnp.max(jnp.abs(out2 - ref2)))

    print("KERNEL_OK")
</pallas_src>

<mosaic_0001>
module attributes {stable_mosaic.version = 11 : i64} {
  func.func @decoder_kernel(%arg0: i32, %arg1: i32, %arg2: memref<8x128xf32, #tpu.memory_space<vmem>>, %arg3: memref<128x128xf32, #tpu.memory_space<vmem>>, %arg4: memref<1x128xf32, #tpu.memory_space<vmem>>, %arg5: memref<128x128xf32, #tpu.memory_space<vmem>>, %arg6: memref<1x128xf32, #tpu.memory_space<vmem>>, %arg7: memref<128x128xf32, #tpu.memory_space<vmem>>, %arg8: memref<1x128xf32, #tpu.memory_space<vmem>>, %arg9: memref<8x8x128xf32, #tpu.memory_space<vmem>>, %arg10: memref<8x128xf32, #tpu.memory_space<vmem>>, %arg11: memref<8x128xf32, #tpu.memory_space<vmem>>) attributes {dimension_semantics = [#tpu.dimension_semantics<parallel>, #tpu.dimension_semantics<arbitrary>], iteration_bounds = array<i64: 1, 1>, scalar_prefetch = 0 : i64, scratch_operands = 2 : i64, tpu.core_type = #tpu.core_type<tc>, window_params = [{transform_indices = @transform_0, window_bounds = array<i64: 8, 128>}, {pipeline_mode = #tpu.pipeline_mode<synchronous>, transform_indices = @transform_1, window_bounds = array<i64: 128, 128>}, {pipeline_mode = #tpu.pipeline_mode<synchronous>, transform_indices = @transform_2, window_bounds = array<i64: 1, 128>}, {pipeline_mode = #tpu.pipeline_mode<synchronous>, transform_indices = @transform_3, window_bounds = array<i64: 128, 128>}, {pipeline_mode = #tpu.pipeline_mode<synchronous>, transform_indices = @transform_4, window_bounds = array<i64: 1, 128>}, {pipeline_mode = #tpu.pipeline_mode<synchronous>, transform_indices = @transform_5, window_bounds = array<i64: 128, 128>}, {pipeline_mode = #tpu.pipeline_mode<synchronous>, transform_indices = @transform_6, window_bounds = array<i64: 1, 128>}, {transform_indices = @transform_7, window_bounds = array<i64: 8, 8, 128>}]} {
    %c0_i32 = arith.constant 0 : i32
    %0 = arith.cmpi eq, %arg1, %c0_i32 : i32
    %1 = arith.extui %0 : i1 to i32
    %c0_i32_0 = arith.constant 0 : i32
    %2 = arith.cmpi ne, %1, %c0_i32_0 : i32
    scf.if %2 {
      %c0_32 = arith.constant 0 : index
      %c0_33 = arith.constant 0 : index
      %55 = vector.load %arg2[%c0_32, %c0_33] : memref<8x128xf32, #tpu.memory_space<vmem>>, vector<8x128xf32>
      %c0_34 = arith.constant 0 : index
      %c0_35 = arith.constant 0 : index
      %56 = vector.load %arg3[%c0_34, %c0_35] : memref<128x128xf32, #tpu.memory_space<vmem>>, vector<128x128xf32>
      %cst_36 = arith.constant dense<0.000000e+00> : vector<8x128xf32>
      %57 = tpu.matmul %55, %56, %cst_36 {dimension_numbers = #tpu.dot_dimension_numbers<[1], [0], [0], [1], [0, 0, 1, 1], [], []>} : vector<8x128xf32>, vector<128x128xf32>, vector<8x128xf32> -> vector<8x128xf32>
      %c0_37 = arith.constant 0 : index
      %c0_38 = arith.constant 0 : index
      %58 = vector.load %arg4[%c0_37, %c0_38] : memref<1x128xf32, #tpu.memory_space<vmem>>, vector<1x128xf32>
      %59 = vector.broadcast %58 : vector<1x128xf32> to vector<8x128xf32>
      %60 = arith.addf %57, %59 : vector<8x128xf32>
      %c0_39 = arith.constant 0 : index
      %c0_40 = arith.constant 0 : index
      %61 = vector.load %arg5[%c0_39, %c0_40] : memref<128x128xf32, #tpu.memory_space<vmem>>, vector<128x128xf32>
      %cst_41 = arith.constant dense<0.000000e+00> : vector<8x128xf32>
      %62 = tpu.matmul %60, %61, %cst_41 {dimension_numbers = #tpu.dot_dimension_numbers<[1], [0], [0], [1], [0, 0, 1, 1], [], []>} : vector<8x128xf32>, vector<128x128xf32>, vector<8x128xf32> -> vector<8x128xf32>
      %c0_42 = arith.constant 0 : index
      %c0_43 = arith.constant 0 : index
      %63 = vector.load %arg6[%c0_42, %c0_43] : memref<1x128xf32, #tpu.memory_space<vmem>>, vector<1x128xf32>
      %64 = vector.broadcast %63 : vector<1x128xf32> to vector<8x128xf32>
      %65 = arith.addf %62, %64 : vector<8x128xf32>
      %c0_44 = arith.constant 0 : index
      %c0_45 = arith.constant 0 : index
      %66 = vector.load %arg8[%c0_44, %c0_45] : memref<1x128xf32, #tpu.memory_space<vmem>>, vector<1x128xf32>
      %67 = vector.broadcast %66 : vector<1x128xf32> to vector<8x128xf32>
      %68 = arith.addf %65, %67 : vector<8x128xf32>
      %c0_46 = arith.constant 0 : index
      %c0_47 = arith.constant 0 : index
      %69 = vector.load %arg11[%c0_46, %c0_47] : memref<8x128xf32, #tpu.memory_space<vmem>>, vector<8x128xf32>
      tpu.vector_store %arg11[%c0_46, %c0_47], %68 {strides = array<i32>} : memref<8x128xf32, #tpu.memory_space<vmem>>, vector<8x128xf32>,
      %cst_48 = arith.constant 0.000000e+00 : f32
      %70 = vector.broadcast %cst_48 : f32 to vector<8x128xf32>
      %c0_49 = arith.constant 0 : index
      %c0_50 = arith.constant 0 : index
      %71 = vector.load %arg10[%c0_49, %c0_50] : memref<8x128xf32, #tpu.memory_space<vmem>>, vector<8x128xf32>
      tpu.vector_store %arg10[%c0_49, %c0_50], %70 {strides = array<i32>} : memref<8x128xf32, #tpu.memory_space<vmem>>, vector<8x128xf32>,
    } else {
    }
    %c0 = arith.constant 0 : index
    %c0_1 = arith.constant 0 : index
    %3 = vector.load %arg7[%c0, %c0_1] : memref<128x128xf32, #tpu.memory_space<vmem>>, vector<128x128xf32>
    %c0_2 = arith.constant 0 : index
    %c0_3 = arith.constant 0 : index
    %4 = vector.load %arg11[%c0_2, %c0_3] : memref<8x128xf32, #tpu.memory_space<vmem>>, vector<8x128xf32>
    %c0_4 = arith.constant 0 : index
    %c0_5 = arith.constant 0 : index
    %5 = vector.load %arg10[%c0_4, %c0_5] : memref<8x128xf32, #tpu.memory_space<vmem>>, vector<8x128xf32>
    %cst = arith.constant dense<0.000000e+00> : vector<8x128xf32>
    %6 = tpu.matmul %5, %3, %cst {dimension_numbers = #tpu.dot_dimension_numbers<[1], [0], [0], [1], [0, 0, 1, 1], [], []>} : vector<8x128xf32>, vector<128x128xf32>, vector<8x128xf32> -> vector<8x128xf32>
    %7 = arith.addf %4, %6 : vector<8x128xf32>
    %8 = math.tanh %7 : vector<8x128xf32>
    %c0_6 = arith.constant 0 : index
    %c0_7 = arith.constant 0 : index
    %c0_8 = arith.constant 0 : index
    %9 = vector.load %arg9[%c0_6, %c0_7, %c0_8] : memref<8x8x128xf32, #tpu.memory_space<vmem>>, vector<1x8x128xf32>
    %10 = vector.shape_cast %9 : vector<1x8x128xf32> to vector<8x128xf32>
    %11 = vector.shape_cast %8 : vector<8x128xf32> to vector<1x8x128xf32>
    tpu.vector_store %arg9[%c0_6, %c0_7, %c0_8], %11 {strides = array<i32>} : memref<8x8x128xf32, #tpu.memory_space<vmem>>, vector<1x8x128xf32>,
    %cst_9 = arith.constant dense<0.000000e+00> : vector<8x128xf32>
    %12 = tpu.matmul %8, %3, %cst_9 {dimension_numbers = #tpu.dot_dimension_numbers<[1], [0], [0], [1], [0, 0, 1, 1], [], []>} : vector<8x128xf32>, vector<128x128xf32>, vector<8x128xf32> -> vector<8x128xf32>
    %13 = arith.addf %4, %12 : vector<8x128xf32>
    %14 = math.tanh %13 : vector<8x128xf32>
    %c1 = arith.constant 1 : index
    %c0_10 = arith.constant 0 : index
    %c0_11 = arith.constant 0 : index
    %15 = vector.load %arg9[%c1, %c0_10, %c0_11] : memref<8x8x128xf32, #tpu.memory_space<vmem>>, vector<1x8x128xf32>
    %16 = vector.shape_cast %15 : vector<1x8x128xf32> to vector<8x128xf32>
    %17 = vector.shape_cast %14 : vector<8x128xf32> to vector<1x8x128xf32>
    tpu.vector_store %arg9[%c1, %c0_10, %c0_11], %17 {strides = array<i32>} : memref<8x8x128xf32, #tpu.memory_space<vmem>>, vector<1x8x128xf32>,
    %cst_12 = arith.constant dense<0.000000e+00> : vector<8x128xf32>
    %18 = tpu.matmul %14, %3, %cst_12 {dimension_numbers = #tpu.dot_dimension_numbers<[1], [0], [0], [1], [0, 0, 1, 1], [], []>} : vector<8x128xf32>, vector<128x128xf32>, vector<8x128xf32> -> vector<8x128xf32>
    %19 = arith.addf %4, %18 : vector<8x128xf32>
    %20 = math.tanh %19 : vector<8x128xf32>
    %c2 = arith.constant 2 : index
    %c0_13 = arith.constant 0 : index
    %c0_14 = arith.constant 0 : index
    %21 = vector.load %arg9[%c2, %c0_13, %c0_14] : memref<8x8x128xf32, #tpu.memory_space<vmem>>, vector<1x8x128xf32>
    %22 = vector.shape_cast %21 : vector<1x8x128xf32> to vector<8x128xf32>
    %23 = vector.shape_cast %20 : vector<8x128xf32> to vector<1x8x128xf32>
    tpu.vector_store %arg9[%c2, %c0_13, %c0_14], %23 {strides = array<i32>} : memref<8x8x128xf32, #tpu.memory_space<vmem>>, vector<1x8x128xf32>,
    %cst_15 = arith.constant dense<0.000000e+00> : vector<8x128xf32>
    %24 = tpu.matmul %20, %3, %cst_15 {dimension_numbers = #tpu.dot_dimension_numbers<[1], [0], [0], [1], [0, 0, 1, 1], [], []>} : vector<8x128xf32>, vector<128x128xf32>, vector<8x128xf32> -> vector<8x128xf32>
    %25 = arith.addf %4, %24 : vector<8x128xf32>
    %26 = math.tanh %25 : vector<8x128xf32>
    %c3 = arith.constant 3 : index
    %c0_16 = arith.constant 0 : index
    %c0_17 = arith.constant 0 : index
    %27 = vector.load %arg9[%c3, %c0_16, %c0_17] : memref<8x8x128xf32, #tpu.memory_space<vmem>>, vector<1x8x128xf32>
    %28 = vector.shape_cast %27 : vector<1x8x128xf32> to vector<8x128xf32>
    %29 = vector.shape_cast %26 : vector<8x128xf32> to vector<1x8x128xf32>
    tpu.vector_store %arg9[%c3, %c0_16, %c0_17], %29 {strides = array<i32>} : memref<8x8x128xf32, #tpu.memory_space<vmem>>, vector<1x8x128xf32>,
    %cst_18 = arith.constant dense<0.000000e+00> : vector<8x128xf32>
    %30 = tpu.matmul %26, %3, %cst_18 {dimension_numbers = #tpu.dot_dimension_numbers<[1], [0], [0], [1], [0, 0, 1, 1], [], []>} : vector<8x128xf32>, vector<128x128xf32>, vector<8x128xf32> -> vector<8x128xf32>
    %31 = arith.addf %4, %30 : vector<8x128xf32>
    %32 = math.tanh %31 : vector<8x128xf32>
    %c4 = arith.constant 4 : index
    %c0_19 = arith.constant 0 : index
    %c0_20 = arith.constant 0 : index
    %33 = vector.load %arg9[%c4, %c0_19, %c0_20] : memref<8x8x128xf32, #tpu.memory_space<vmem>>, vector<1x8x128xf32>
    %34 = vector.shape_cast %33 : vector<1x8x128xf32> to vector<8x128xf32>
    %35 = vector.shape_cast %32 : vector<8x128xf32> to vector<1x8x128xf32>
    tpu.vector_store %arg9[%c4, %c0_19, %c0_20], %35 {strides = array<i32>} : memref<8x8x128xf32, #tpu.memory_space<vmem>>, vector<1x8x128xf32>,
    %cst_21 = arith.constant dense<0.000000e+00> : vector<8x128xf32>
    %36 = tpu.matmul %32, %3, %cst_21 {dimension_numbers = #tpu.dot_dimension_numbers<[1], [0], [0], [1], [0, 0, 1, 1], [], []>} : vector<8x128xf32>, vector<128x128xf32>, vector<8x128xf32> -> vector<8x128xf32>
    %37 = arith.addf %4, %36 : vector<8x128xf32>
    %38 = math.tanh %37 : vector<8x128xf32>
    %c5 = arith.constant 5 : index
    %c0_22 = arith.constant 0 : index
    %c0_23 = arith.constant 0 : index
    %39 = vector.load %arg9[%c5, %c0_22, %c0_23] : memref<8x8x128xf32, #tpu.memory_space<vmem>>, vector<1x8x128xf32>
    %40 = vector.shape_cast %39 : vector<1x8x128xf32> to vector<8x128xf32>
    %41 = vector.shape_cast %38 : vector<8x128xf32> to vector<1x8x128xf32>
    tpu.vector_store %arg9[%c5, %c0_22, %c0_23], %41 {strides = array<i32>} : memref<8x8x128xf32, #tpu.memory_space<vmem>>, vector<1x8x128xf32>,
    %cst_24 = arith.constant dense<0.000000e+00> : vector<8x128xf32>
    %42 = tpu.matmul %38, %3, %cst_24 {dimension_numbers = #tpu.dot_dimension_numbers<[1], [0], [0], [1], [0, 0, 1, 1], [], []>} : vector<8x128xf32>, vector<128x128xf32>, vector<8x128xf32> -> vector<8x128xf32>
    %43 = arith.addf %4, %42 : vector<8x128xf32>
    %44 = math.tanh %43 : vector<8x128xf32>
    %c6 = arith.constant 6 : index
    %c0_25 = arith.constant 0 : index
    %c0_26 = arith.constant 0 : index
    %45 = vector.load %arg9[%c6, %c0_25, %c0_26] : memref<8x8x128xf32, #tpu.memory_space<vmem>>, vector<1x8x128xf32>
    %46 = vector.shape_cast %45 : vector<1x8x128xf32> to vector<8x128xf32>
    %47 = vector.shape_cast %44 : vector<8x128xf32> to vector<1x8x128xf32>
    tpu.vector_store %arg9[%c6, %c0_25, %c0_26], %47 {strides = array<i32>} : memref<8x8x128xf32, #tpu.memory_space<vmem>>, vector<1x8x128xf32>,
    %cst_27 = arith.constant dense<0.000000e+00> : vector<8x128xf32>
    %48 = tpu.matmul %44, %3, %cst_27 {dimension_numbers = #tpu.dot_dimension_numbers<[1], [0], [0], [1], [0, 0, 1, 1], [], []>} : vector<8x128xf32>, vector<128x128xf32>, vector<8x128xf32> -> vector<8x128xf32>
    %49 = arith.addf %4, %48 : vector<8x128xf32>
    %50 = math.tanh %49 : vector<8x128xf32>
    %c7 = arith.constant 7 : index
    %c0_28 = arith.constant 0 : index
    %c0_29 = arith.constant 0 : index
    %51 = vector.load %arg9[%c7, %c0_28, %c0_29] : memref<8x8x128xf32, #tpu.memory_space<vmem>>, vector<1x8x128xf32>
    %52 = vector.shape_cast %51 : vector<1x8x128xf32> to vector<8x128xf32>
    %53 = vector.shape_cast %50 : vector<8x128xf32> to vector<1x8x128xf32>
    tpu.vector_store %arg9[%c7, %c0_28, %c0_29], %53 {strides = array<i32>} : memref<8x8x128xf32, #tpu.memory_space<vmem>>, vector<1x8x128xf32>,
    %c0_30 = arith.constant 0 : index
    %c0_31 = arith.constant 0 : index
    %54 = vector.load %arg10[%c0_30, %c0_31] : memref<8x128xf32, #tpu.memory_space<vmem>>, vector<8x128xf32>
    tpu.vector_store %arg10[%c0_30, %c0_31], %50 {strides = array<i32>} : memref<8x128xf32, #tpu.memory_space<vmem>>, vector<8x128xf32>,
    return
  }
  func.func @transform_0(%arg0: i32, %arg1: i32) -> (i32, i32) {
    %c0_i32 = arith.constant 0 : i32
    %c0_i32_0 = arith.constant 0 : i32
    return %arg0, %c0_i32 : i32, i32
  }
  func.func @transform_1(%arg0: i32, %arg1: i32) -> (i32, i32) {
    %c0_i32 = arith.constant 0 : i32
    %c0_i32_0 = arith.constant 0 : i32
    %c0_i32_1 = arith.constant 0 : i32
    return %c0_i32, %c0_i32_0 : i32, i32
  }
  func.func @transform_2(%arg0: i32, %arg1: i32) -> (i32, i32) {
    %c0_i32 = arith.constant 0 : i32
    %c0_i32_0 = arith.constant 0 : i32
    %c0_i32_1 = arith.constant 0 : i32
    return %c0_i32, %c0_i32_0 : i32, i32
  }
  func.func @transform_3(%arg0: i32, %arg1: i32) -> (i32, i32) {
    %c0_i32 = arith.constant 0 : i32
    %c0_i32_0 = arith.constant 0 : i32
    %c0_i32_1 = arith.constant 0 : i32
    return %c0_i32, %c0_i32_0 : i32, i32
  }
  func.func @transform_4(%arg0: i32, %arg1: i32) -> (i32, i32) {
    %c0_i32 = arith.constant 0 : i32
    %c0_i32_0 = arith.constant 0 : i32
    %c0_i32_1 = arith.constant 0 : i32
    return %c0_i32, %c0_i32_0 : i32, i32
  }
  func.func @transform_5(%arg0: i32, %arg1: i32) -> (i32, i32) {
    %c0_i32 = arith.constant 0 : i32
    %c0_i32_0 = arith.constant 0 : i32
    %c0_i32_1 = arith.constant 0 : i32
    return %c0_i32, %c0_i32_0 : i32, i32
  }
  func.func @transform_6(%arg0: i32, %arg1: i32) -> (i32, i32) {
    %c0_i32 = arith.constant 0 : i32
    %c0_i32_0 = arith.constant 0 : i32
    %c0_i32_1 = arith.constant 0 : i32
    return %c0_i32, %c0_i32_0 : i32, i32
  }
  func.func @transform_7(%arg0: i32, %arg1: i32) -> (i32, i32, i32) {
    %c0_i32 = arith.constant 0 : i32
    %c0_i32_0 = arith.constant 0 : i32
    return %arg1, %arg0, %c0_i32 : i32, i32, i32
  }
}

</mosaic_0001>

<llo_original>
// kernel: tpu_custom_call.1
$region0: #{tpu_custom_call.1}
  #allocation0 [shape = 'u32[]', space=smem, size = 0x4, offset = 0x4, fixed_abs, tag = 'smem constant byte address 0x4 - core index']
  #allocation1 [shape = 'u32[144,128]{1,0:T(1,128)}', space=vmem, size = 0x12000, scoped, tag = 'internal scratch']
  #allocation2 [shape = 'f32[8,128]{1,0:T(8,128)}', space=vmem, size = 0x1000, scoped, tag = 'scratch operand']
  #allocation3 [shape = 'f32[8,128]{1,0:T(8,128)}', space=vmem, size = 0x1000, scoped, tag = 'scratch operand']
  %s0 = inlined_call_operand.hbm [shape: f32[8,128], index: 0, kind: input, shape index: {}]
  %s1 = inlined_call_operand.hbm [shape: f32[128,128], index: 1, kind: input, shape index: {}]
  %s2 = inlined_call_operand.vmem [shape: f32[1,128], index: 2, kind: input, shape index: {}]
  %s3 = inlined_call_operand.hbm [shape: f32[128,128], index: 3, kind: input, shape index: {}]
  %s4 = inlined_call_operand.vmem [shape: f32[1,128], index: 4, kind: input, shape index: {}]
  %s5 = inlined_call_operand.hbm [shape: f32[128,128], index: 5, kind: input, shape index: {}]
  %s6 = inlined_call_operand.vmem [shape: f32[1,128], index: 6, kind: input, shape index: {}]
  %s7 = inlined_call_operand.hbm [shape: f32[8,8,128], index: 7, kind: output, shape index: {}]
  %s8 = sld [smem:[#allocation0]]
  $region58: #{tpu_custom_call.1} parent=0
    _
  %s10 = ssub.s32 1, %s8
  %s11 = scalar_select 0, %s10, %s8
  $region1: #{tpu_custom_call.1} parent=0
    #allocation4 [shape = 'u8[4096]{0}', space=vmem, size = 0x1000, scoped, tag = 'input window, operand 0, single buffered']
    #allocation5 [shape = 's32[1]{0}', space=sflag, size = 0x4, scoped, tag = 'scoped memory for tpu_custom_call.1']
    #allocation6 [shape = 's32[1]{0}', space=sflag, size = 0x4, scoped, tag = 'scoped memory for tpu_custom_call.1']
    #allocation7 [shape = 'u8[65536]{0}', space=vmem, size = 0x10000, scoped, tag = 'input window, operand 1, single buffered']
    #allocation8 [shape = 's32[1]{0}', space=sflag, size = 0x4, scoped, tag = 'scoped memory for tpu_custom_call.1']
    #allocation9 [shape = 'u8[65536]{0}', space=vmem, size = 0x10000, scoped, tag = 'input window, operand 3, single buffered']
    #allocation10 [shape = 'u8[65536]{0}', space=vmem, size = 0x10000, scoped, tag = 'input window, operand 5, single buffered']
    #allocation11 [shape = 's32[1]{0}', space=sflag, size = 0x4, scoped, tag = 'scoped memory for tpu_custom_call.1']
    #allocation12 [shape = 'u8[32768]{0}', space=vmem, size = 0x8000, scoped, tag = 'output window, operand 0, single buffered']
    %12 = vsyncpa [#allocation5], 0
    %13 = vsyncpa [#allocation8], 0
    %14 = vsyncpa [#allocation11], 0
    %15 = vsyncpa [#allocation6], 0
    // Predicated region
    $region2: #{tpu_custom_call.1} parent=1 // pred_check
      _
    $region3: #{tpu_custom_call.1} parent=1 // pred_check_branch
      %17 = sbr.rel (0) target = $region5
    $region4: #{tpu_custom_call.1} parent=1 // pred_region
      %s19 = ssub.s32 128, 128
      %20 = vsyncadd [#allocation5], %s19
      %s22 = sshll.u32 [#allocation4], 4
      %s23 = int_to_ptr.vmem [resolvable:$true] %s22
      %25 = dma.hbm_to_vmem [thread:$0]  %s0, 128, %s23, [#allocation5]
    $region5: #{tpu_custom_call.1} parent=1 // pred_fallthru
      _
    // Predicated region
    $region6: #{tpu_custom_call.1} parent=1 // pred_check
      _
    $region7: #{tpu_custom_call.1} parent=1 // pred_check_branch
      %27 = sbr.rel (0) target = $region9
    $region8: #{tpu_custom_call.1} parent=1 // pred_region
      %s29 = ssub.s32 2048, 2048
      %30 = vsyncadd [#allocation8], %s29
      %s31 = sshll.u32 [#allocation7], 4
      %s32 = int_to_ptr.vmem [resolvable:$true] %s31
      %37 = dma.hbm_to_vmem [thread:$0]  %s1, 2048, %s32, [#allocation8], 128, 128, 8
    $region9: #{tpu_custom_call.1} parent=1 // pred_fallthru
      _
    // Predicated region
    $region10: #{tpu_custom_call.1} parent=1 // pred_check
      _
    $region11: #{tpu_custom_call.1} parent=1 // pred_check_branch
      %39 = sbr.rel (0) target = $region13
    $region12: #{tpu_custom_call.1} parent=1 // pred_region
      _
    $region13: #{tpu_custom_call.1} parent=1 // pred_fallthru
      _
    // Predicated region
    $region14: #{tpu_custom_call.1} parent=1 // pred_check
      _
    $region15: #{tpu_custom_call.1} parent=1 // pred_check_branch
      %41 = sbr.rel (0) target = $region17
    $region16: #{tpu_custom_call.1} parent=1 // pred_region
      %s43 = ssub.s32 2048, 2048
      %44 = vsyncadd [#allocation8], %s43
      %s45 = sshll.u32 [#allocation9], 4
      %s46 = int_to_ptr.vmem [resolvable:$true] %s45
      %51 = dma.hbm_to_vmem [thread:$0]  %s3, 2048, %s46, [#allocation8], 128, 128, 8
    $region17: #{tpu_custom_call.1} parent=1 // pred_fallthru
      _
    // Predicated region
    $region18: #{tpu_custom_call.1} parent=1 // pred_check
      _
    $region19: #{tpu_custom_call.1} parent=1 // pred_check_branch
      %53 = sbr.rel (0) target = $region21
    $region20: #{tpu_custom_call.1} parent=1 // pred_region
      _
    $region21: #{tpu_custom_call.1} parent=1 // pred_fallthru
      _
    // Predicated region
    $region22: #{tpu_custom_call.1} parent=1 // pred_check
      _
    $region23: #{tpu_custom_call.1} parent=1 // pred_check_branch
      %55 = sbr.rel (0) target = $region25
    $region24: #{tpu_custom_call.1} parent=1 // pred_region
      %s57 = ssub.s32 2048, 2048
      %58 = vsyncadd [#allocation11], %s57
      %s59 = sshll.u32 [#allocation10], 4
      %s60 = int_to_ptr.vmem [resolvable:$true] %s59
      %65 = dma.hbm_to_vmem [thread:$0]  %s5, 2048, %s60, [#allocation11], 128, 128, 8
    $region25: #{tpu_custom_call.1} parent=1 // pred_fallthru
      _
    // Predicated region
    $region26: #{tpu_custom_call.1} parent=1 // pred_check
      _
    $region27: #{tpu_custom_call.1} parent=1 // pred_check_branch
      %67 = sbr.rel (0) target = $region29
    $region28: #{tpu_custom_call.1} parent=1 // pred_region
      _
    $region29: #{tpu_custom_call.1} parent=1 // pred_fallthru
      _
    // Predicated region
    $region30: #{tpu_custom_call.1} parent=1 // pred_check
      _
    $region31: #{tpu_custom_call.1} parent=1 // pred_check_branch
      %69 = sbr.rel (0) target = $region33
    $region32: #{tpu_custom_call.1} parent=1 // pred_region
      %70 = dma.done [#allocation5], 128
    $region33: #{tpu_custom_call.1} parent=1 // pred_fallthru
      _
    // Predicated region
    $region34: #{tpu_custom_call.1} parent=1 // pred_check
      _
    $region35: #{tpu_custom_call.1} parent=1 // pred_check_branch
      %72 = sbr.rel (0) target = $region37
    $region36: #{tpu_custom_call.1} parent=1 // pred_region
      %73 = dma.done [#allocation8], 2048
    $region37: #{tpu_custom_call.1} parent=1 // pred_fallthru
      _
    // Predicated region
    $region38: #{tpu_custom_call.1} parent=1 // pred_check
      _
    $region39: #{tpu_custom_call.1} parent=1 // pred_check_branch
      %75 = sbr.rel (0) target = $region41
    $region40: #{tpu_custom_call.1} parent=1 // pred_region
      %76 = dma.done [#allocation8], 2048
    $region41: #{tpu_custom_call.1} parent=1 // pred_fallthru
      _
    // Predicated region
    $region42: #{tpu_custom_call.1} parent=1 // pred_check
      _
    $region43: #{tpu_custom_call.1} parent=1 // pred_check_branch
      %78 = sbr.rel (0) target = $region45
    $region44: #{tpu_custom_call.1} parent=1 // pred_region
      %79 = dma.done [#allocation11], 2048
    $region45: #{tpu_custom_call.1} parent=1 // pred_fallthru
      _
    %p80 = scmp.eq.s32.totalorder 0, 0
    // Predicated region
    $region46: #{tpu_custom_call.1} parent=1 // pred_check
      %p81 = pneg %p80
    $region47: #{tpu_custom_call.1} parent=1 // pred_check_branch
      %83 = sbr.rel (%p81) target = $region49
    $region48: #{tpu_custom_call.1} parent=1 // pred_region
      %v84 = vld [vmem:[#allocation4] sm:$0xff]
      %v85 = vld [vmem:[#allocation7] sm:$0xff]
      %v86 = vld [vmem:[#allocation7 + $0x8] sm:$0xff]
      %v87 = vld [vmem:[#allocation7 + $0x10] sm:$0xff]
      %v88 = vld [vmem:[#allocation7 + $0x18] sm:$0xff]
      %v89 = vld [vmem:[#allocation7 + $0x20] sm:$0xff]
      %v90 = vld [vmem:[#allocation7 + $0x28] sm:$0xff]
      %v91 = vld [vmem:[#allocation7 + $0x30] sm:$0xff]
      %v92 = vld [vmem:[#allocation7 + $0x38] sm:$0xff]
      %v93 = vld [vmem:[#allocation7 + $0x40] sm:$0xff]
      %v94 = vld [vmem:[#allocation7 + $0x48] sm:$0xff]
      %v95 = vld [vmem:[#allocation7 + $0x50] sm:$0xff]
      %v96 = vld [vmem:[#allocation7 + $0x58] sm:$0xff]
      %v97 = vld [vmem:[#allocation7 + $0x60] sm:$0xff]
      %v98 = vld [vmem:[#allocation7 + $0x68] sm:$0xff]
      %v99 = vld [vmem:[#allocation7 + $0x70] sm:$0xff]
      %v100 = vld [vmem:[#allocation7 + $0x78] sm:$0xff]
      %v101 = vld [vmem:[%s2] sm:$0x1]
      %v103 = vlaneseq
      %v104 = vshrl.u32 %v103, 7
      %v105 = vsub.s32 0, %v104
      %v106 = vrot.slane %v101, %v105
      %108 = vmatprep.subr.mxu0 0.0
      %109 = vmatpush1.msra.mxu0 %v100
      %110 = vmatprep.subr.mxu0 0.0
      %111 = vmatpush1.msra.mxu0 %v99
      %112 = vmatprep.subr.mxu0 0.0
      %113 = vmatpush1.msra.mxu0 %v98
      %114 = vmatprep.subr.mxu0 0.0
      %115 = vmatpush1.msra.mxu0 %v97
      %116 = vmatprep.subr.mxu0 0.0
      %117 = vmatpush1.msra.mxu0 %v96
      %118 = vmatprep.subr.mxu0 0.0
      %119 = vmatpush1.msra.mxu0 %v95
      %120 = vmatprep.subr.mxu0 0.0
      %121 = vmatpush1.msra.mxu0 %v94
      %122 = vmatprep.subr.mxu0 0.0
      %123 = vmatpush1.msra.mxu0 %v93
      %124 = vmatprep.subr.mxu0 0.0
      %125 = vmatpush1.msra.mxu0 %v92
      %126 = vmatprep.subr.mxu0 0.0
      %127 = vmatpush1.msra.mxu0 %v91
      %128 = vmatprep.subr.mxu0 0.0
      %129 = vmatpush1.msra.mxu0 %v90
      %130 = vmatprep.subr.mxu0 0.0
      %131 = vmatpush1.msra.mxu0 %v89
      %132 = vmatprep.subr.mxu0 0.0
      %133 = vmatpush1.msra.mxu0 %v88
      %134 = vmatprep.subr.mxu0 0.0
      %135 = vmatpush1.msra.mxu0 %v87
      %136 = vmatprep.subr.mxu0 0.0
      %137 = vmatpush1.msra.mxu0 %v86
      %138 = vmatprep.subr.mxu0 0.0
      %139 = vmatpush1.msra.mxu0 %v85
      %140 = vmatprep.subr.mxu0 0.0
      %141 = vmatpush2.msra.mxu0 0.0
      %142 = vmatprep.subr.mxu0 0.0
      %143 = vmatpush2.msra.mxu0 0.0
      %144 = vmatprep.subr.mxu0 0.0
      %145 = vmatpush2.msra.mxu0 0.0
      %146 = vmatprep.subr.mxu0 0.0
      %147 = vmatpush2.msra.mxu0 0.0
      %148 = vmatprep.subr.mxu0 0.0
      %149 = vmatpush2.msra.mxu0 0.0
      %150 = vmatprep.subr.mxu0 0.0
      %151 = vmatpush2.msra.mxu0 0.0
      %152 = vmatprep.subr.mxu0 0.0
      %153 = vmatpush2.msra.mxu0 0.0
      %154 = vmatprep.subr.mxu0 0.0
      %155 = vmatpush2.msra.mxu0 0.0
      %156 = vmatprep.subr.mxu0 0.0
      %157 = vmatpush2.msra.mxu0 0.0
      %158 = vmatprep.subr.mxu0 0.0
      %159 = vmatpush2.msra.mxu0 0.0
      %160 = vmatprep.subr.mxu0 0.0
      %161 = vmatpush2.msra.mxu0 0.0
      %162 = vmatprep.subr.mxu0 0.0
      %163 = vmatpush2.msra.mxu0 0.0
      %164 = vmatprep.subr.mxu0 0.0
      %165 = vmatpush2.msra.mxu0 0.0
      %166 = vmatprep.subr.mxu0 0.0
      %167 = vmatpush2.msra.mxu0 0.0
      %168 = vmatprep.subr.mxu0 0.0
      %169 = vmatpush2.msra.mxu0 0.0
      %170 = vmatprep.subr.mxu0 0.0
      %171 = vmatpush2.msra.mxu0 0.0
      %172 = vmatprep.mubr.f32.mxu0 0.0
      %173 = vmatmul.mubr.f32.gmra.mxu0 %v84
      %v174 = vpop.f32.mrf.mxu0
      %v175 = vadd.f32 %v106, %v174
      %v176 = vpop.f32.mrf.mxu0
      %177 = vdwg.mxu0
      %v178 = vld [vmem:[#allocation9] sm:$0xff]
      %v179 = vld [vmem:[#allocation9 + $0x8] sm:$0xff]
      %v180 = vld [vmem:[#allocation9 + $0x10] sm:$0xff]
      %v181 = vld [vmem:[#allocation9 + $0x18] sm:$0xff]
      %v182 = vld [vmem:[#allocation9 + $0x20] sm:$0xff]
      %v183 = vld [vmem:[#allocation9 + $0x28] sm:$0xff]
      %v184 = vld [vmem:[#allocation9 + $0x30] sm:$0xff]
      %v185 = vld [vmem:[#allocation9 + $0x38] sm:$0xff]
      %v186 = vld [vmem:[#allocation9 + $0x40] sm:$0xff]
      %v187 = vld [vmem:[#allocation9 + $0x48] sm:$0xff]
      %v188 = vld [vmem:[#allocation9 + $0x50] sm:$0xff]
      %v189 = vld [vmem:[#allocation9 + $0x58] sm:$0xff]
      %v190 = vld [vmem:[#allocation9 + $0x60] sm:$0xff]
      %v191 = vld [vmem:[#allocation9 + $0x68] sm:$0xff]
      %v192 = vld [vmem:[#allocation9 + $0x70] sm:$0xff]
      %v193 = vld [vmem:[#allocation9 + $0x78] sm:$0xff]
      %v194 = vld [vmem:[%s4] sm:$0x1]
      %v196 = vlaneseq
      %v197 = vshrl.u32 %v196, 7
      %v198 = vsub.s32 0, %v197
      %v199 = vrot.slane %v194, %v198
      %201 = vmatprep.subr.mxu0 0.0
      %202 = vmatpush1.msra.mxu0 %v193
      %203 = vmatprep.subr.mxu0 0.0
      %204 = vmatpush1.msra.mxu0 %v192
      %205 = vmatprep.subr.mxu0 0.0
      %206 = vmatpush1.msra.mxu0 %v191
      %207 = vmatprep.subr.mxu0 0.0
      %208 = vmatpush1.msra.mxu0 %v190
      %209 = vmatprep.subr.mxu0 0.0
      %210 = vmatpush1.msra.mxu0 %v189
      %211 = vmatprep.subr.mxu0 0.0
      %212 = vmatpush1.msra.mxu0 %v188
      %213 = vmatprep.subr.mxu0 0.0
      %214 = vmatpush1.msra.mxu0 %v187
      %215 = vmatprep.subr.mxu0 0.0
      %216 = vmatpush1.msra.mxu0 %v186
      %217 = vmatprep.subr.mxu0 0.0
      %218 = vmatpush1.msra.mxu0 %v185
      %219 = vmatprep.subr.mxu0 0.0
      %220 = vmatpush1.msra.mxu0 %v184
      %221 = vmatprep.subr.mxu0 0.0
      %222 = vmatpush1.msra.mxu0 %v183
      %223 = vmatprep.subr.mxu0 0.0
      %224 = vmatpush1.msra.mxu0 %v182
      %225 = vmatprep.subr.mxu0 0.0
      %226 = vmatpush1.msra.mxu0 %v181
      %227 = vmatprep.subr.mxu0 0.0
      %228 = vmatpush1.msra.mxu0 %v180
      %229 = vmatprep.subr.mxu0 0.0
      %230 = vmatpush1.msra.mxu0 %v179
      %231 = vmatprep.subr.mxu0 0.0
      %232 = vmatpush1.msra.mxu0 %v178
      %233 = vmatprep.subr.mxu0 0.0
      %234 = vmatpush2.msra.mxu0 0.0
      %235 = vmatprep.subr.mxu0 0.0
      %236 = vmatpush2.msra.mxu0 0.0
      %237 = vmatprep.subr.mxu0 0.0
      %238 = vmatpush2.msra.mxu0 0.0
      %239 = vmatprep.subr.mxu0 0.0
      %240 = vmatpush2.msra.mxu0 0.0
      %241 = vmatprep.subr.mxu0 0.0
      %242 = vmatpush2.msra.mxu0 0.0
      %243 = vmatprep.subr.mxu0 0.0
      %244 = vmatpush2.msra.mxu0 0.0
      %245 = vmatprep.subr.mxu0 0.0
      %246 = vmatpush2.msra.mxu0 0.0
      %247 = vmatprep.subr.mxu0 0.0
      %248 = vmatpush2.msra.mxu0 0.0
      %249 = vmatprep.subr.mxu0 0.0
      %250 = vmatpush2.msra.mxu0 0.0
      %251 = vmatprep.subr.mxu0 0.0
      %252 = vmatpush2.msra.mxu0 0.0
      %253 = vmatprep.subr.mxu0 0.0
      %254 = vmatpush2.msra.mxu0 0.0
      %255 = vmatprep.subr.mxu0 0.0
      %256 = vmatpush2.msra.mxu0 0.0
      %257 = vmatprep.subr.mxu0 0.0
      %258 = vmatpush2.msra.mxu0 0.0
      %259 = vmatprep.subr.mxu0 0.0
      %260 = vmatpush2.msra.mxu0 0.0
      %261 = vmatprep.subr.mxu0 0.0
      %262 = vmatpush2.msra.mxu0 0.0
      %263 = vmatprep.subr.mxu0 0.0
      %264 = vmatpush2.msra.mxu0 0.0
      %265 = vmatprep.mubr.f32.mxu0 0.0
      %266 = vmatmul.mubr.f32.gmra.mxu0 %v175
      %v267 = vpop.f32.mrf.mxu0
      %v268 = vadd.f32 %v199, %v267
      %v269 = vpop.f32.mrf.mxu0
      %270 = vdwg.mxu0
      %v271 = vld [vmem:[%s6] sm:$0x1]
      %v273 = vlaneseq
      %v274 = vshrl.u32 %v273, 7
      %v275 = vsub.s32 0, %v274
      %v276 = vrot.slane %v271, %v275
      %v278 = vadd.f32 %v268, %v276
      %279 = vst [vmem:[#allocation3] sm:$0xff] %v278
      %280 = vst [vmem:[#allocation2] sm:$0xff] 0.0
    $region49: #{tpu_custom_call.1} parent=1 // pred_fallthru
      _
    %v281 = vld [vmem:[#allocation10] sm:$0xff]
    %v282 = vld [vmem:[#allocation10 + $0x8] sm:$0xff]
    %v283 = vld [vmem:[#allocation10 + $0x10] sm:$0xff]
    %v284 = vld [vmem:[#allocation10 + $0x18] sm:$0xff]
    %v285 = vld [vmem:[#allocation10 + $0x20] sm:$0xff]
    %v286 = vld [vmem:[#allocation10 + $0x28] sm:$0xff]
    %v287 = vld [vmem:[#allocation10 + $0x30] sm:$0xff]
    %v288 = vld [vmem:[#allocation10 + $0x38] sm:$0xff]
    %v289 = vld [vmem:[#allocation10 + $0x40] sm:$0xff]
    %v290 = vld [vmem:[#allocation10 + $0x48] sm:$0xff]
    %v291 = vld [vmem:[#allocation10 + $0x50] sm:$0xff]
    %v292 = vld [vmem:[#allocation10 + $0x58] sm:$0xff]
    %v293 = vld [vmem:[#allocation10 + $0x60] sm:$0xff]
    %v294 = vld [vmem:[#allocation10 + $0x68] sm:$0xff]
    %v295 = vld [vmem:[#allocation10 + $0x70] sm:$0xff]
    %v296 = vld [vmem:[#allocation10 + $0x78] sm:$0xff]
    %v297 = vld [vmem:[#allocation3] sm:$0xff]
    %v298 = vld [vmem:[#allocation2] sm:$0xff]
    %299 = vmatprep.subr.mxu0 0.0
    %300 = vmatpush1.msra.mxu0 %v296
    %301 = vmatprep.subr.mxu0 0.0
    %302 = vmatpush1.msra.mxu0 %v295
    %303 = vmatprep.subr.mxu0 0.0
    %304 = vmatpush1.msra.mxu0 %v294
    %305 = vmatprep.subr.mxu0 0.0
    %306 = vmatpush1.msra.mxu0 %v293
    %307 = vmatprep.subr.mxu0 0.0
    %308 = vmatpush1.msra.mxu0 %v292
    %309 = vmatprep.subr.mxu0 0.0
    %310 = vmatpush1.msra.mxu0 %v291
    %311 = vmatprep.subr.mxu0 0.0
    %312 = vmatpush1.msra.mxu0 %v290
    %313 = vmatprep.subr.mxu0 0.0
    %314 = vmatpush1.msra.mxu0 %v289
    %315 = vmatprep.subr.mxu0 0.0
    %316 = vmatpush1.msra.mxu0 %v288
    %317 = vmatprep.subr.mxu0 0.0
    %318 = vmatpush1.msra.mxu0 %v287
    %319 = vmatprep.subr.mxu0 0.0
    %320 = vmatpush1.msra.mxu0 %v286
    %321 = vmatprep.subr.mxu0 0.0
    %322 = vmatpush1.msra.mxu0 %v285
    %323 = vmatprep.subr.mxu0 0.0
    %324 = vmatpush1.msra.mxu0 %v284
    %325 = vmatprep.subr.mxu0 0.0
    %326 = vmatpush1.msra.mxu0 %v283
    %327 = vmatprep.subr.mxu0 0.0
    %328 = vmatpush1.msra.mxu0 %v282
    %329 = vmatprep.subr.mxu0 0.0
    %330 = vmatpush1.msra.mxu0 %v281
    %331 = vmatprep.subr.mxu0 0.0
    %332 = vmatpush2.msra.mxu0 0.0
    %333 = vmatprep.subr.mxu0 0.0
    %334 = vmatpush2.msra.mxu0 0.0
    %335 = vmatprep.subr.mxu0 0.0
    %336 = vmatpush2.msra.mxu0 0.0
    %337 = vmatprep.subr.mxu0 0.0
    %338 = vmatpush2.msra.mxu0 0.0
    %339 = vmatprep.subr.mxu0 0.0
    %340 = vmatpush2.msra.mxu0 0.0
    %341 = vmatprep.subr.mxu0 0.0
    %342 = vmatpush2.msra.mxu0 0.0
    %343 = vmatprep.subr.mxu0 0.0
    %344 = vmatpush2.msra.mxu0 0.0
    %345 = vmatprep.subr.mxu0 0.0
    %346 = vmatpush2.msra.mxu0 0.0
    %347 = vmatprep.subr.mxu0 0.0
    %348 = vmatpush2.msra.mxu0 0.0
    %349 = vmatprep.subr.mxu0 0.0
    %350 = vmatpush2.msra.mxu0 0.0
    %351 = vmatprep.subr.mxu0 0.0
    %352 = vmatpush2.msra.mxu0 0.0
    %353 = vmatprep.subr.mxu0 0.0
    %354 = vmatpush2.msra.mxu0 0.0
    %355 = vmatprep.subr.mxu0 0.0
    %356 = vmatpush2.msra.mxu0 0.0
    %357 = vmatprep.subr.mxu0 0.0
    %358 = vmatpush2.msra.mxu0 0.0
    %359 = vmatprep.subr.mxu0 0.0
    %360 = vmatpush2.msra.mxu0 0.0
    %361 = vmatprep.subr.mxu0 0.0
    %362 = vmatpush2.msra.mxu0 0.0
    %363 = vmatprep.mubr.f32.mxu0 0.0
    %364 = vmatmul.mubr.f32.gmra.mxu0 %v298
    %v365 = vpop.f32.mrf.mxu0
    %v366 = vadd.f32 0.0, %v365
    %v367 = vpop.f32.mrf.mxu0
    %368 = vdwg.mxu0
    %v369 = vadd.f32 %v297, %v366
    %v370 = vtanh.pop %v369
    %371 = vst [vmem:[#allocation12] sm:$0xff] %v370
    %372 = vmatprep.subr.mxu0 0.0
    %373 = vmatpush1.msra.mxu0 %v296
    %374 = vmatprep.subr.mxu0 0.0
    %375 = vmatpush1.msra.mxu0 %v295
    %376 = vmatprep.subr.mxu0 0.0
    %377 = vmatpush1.msra.mxu0 %v294
    %378 = vmatprep.subr.mxu0 0.0
    %379 = vmatpush1.msra.mxu0 %v293
    %380 = vmatprep.subr.mxu0 0.0
    %381 = vmatpush1.msra.mxu0 %v292
    %382 = vmatprep.subr.mxu0 0.0
    %383 = vmatpush1.msra.mxu0 %v291
    %384 = vmatprep.subr.mxu0 0.0
    %385 = vmatpush1.msra.mxu0 %v290
    %386 = vmatprep.subr.mxu0 0.0
    %387 = vmatpush1.msra.mxu0 %v289
    %388 = vmatprep.subr.mxu0 0.0
    %389 = vmatpush1.msra.mxu0 %v288
    %390 = vmatprep.subr.mxu0 0.0
    %391 = vmatpush1.msra.mxu0 %v287
    %392 = vmatprep.subr.mxu0 0.0
    %393 = vmatpush1.msra.mxu0 %v286
    %394 = vmatprep.subr.mxu0 0.0
    %395 = vmatpush1.msra.mxu0 %v285
    %396 = vmatprep.subr.mxu0 0.0
    %397 = vmatpush1.msra.mxu0 %v284
    %398 = vmatprep.subr.mxu0 0.0
    %399 = vmatpush1.msra.mxu0 %v283
    %400 = vmatprep.subr.mxu0 0.0
    %401 = vmatpush1.msra.mxu0 %v282
    %402 = vmatprep.subr.mxu0 0.0
    %403 = vmatpush1.msra.mxu0 %v281
    %404 = vmatprep.subr.mxu0 0.0
    %405 = vmatpush2.msra.mxu0 0.0
    %406 = vmatprep.subr.mxu0 0.0
    %407 = vmatpush2.msra.mxu0 0.0
    %408 = vmatprep.subr.mxu0 0.0
    %409 = vmatpush2.msra.mxu0 0.0
    %410 = vmatprep.subr.mxu0 0.0
    %411 = vmatpush2.msra.mxu0 0.0
    %412 = vmatprep.subr.mxu0 0.0
    %413 = vmatpush2.msra.mxu0 0.0
    %414 = vmatprep.subr.mxu0 0.0
    %415 = vmatpush2.msra.mxu0 0.0
    %416 = vmatprep.subr.mxu0 0.0
    %417 = vmatpush2.msra.mxu0 0.0
    %418 = vmatprep.subr.mxu0 0.0
    %419 = vmatpush2.msra.mxu0 0.0
    %420 = vmatprep.subr.mxu0 0.0
    %421 = vmatpush2.msra.mxu0 0.0
    %422 = vmatprep.subr.mxu0 0.0
    %423 = vmatpush2.msra.mxu0 0.0
    %424 = vmatprep.subr.mxu0 0.0
    %425 = vmatpush2.msra.mxu0 0.0
    %426 = vmatprep.subr.mxu0 0.0
    %427 = vmatpush2.msra.mxu0 0.0
    %428 = vmatprep.subr.mxu0 0.0
    %429 = vmatpush2.msra.mxu0 0.0
    %430 = vmatprep.subr.mxu0 0.0
    %431 = vmatpush2.msra.mxu0 0.0
    %432 = vmatprep.subr.mxu0 0.0
    %433 = vmatpush2.msra.mxu0 0.0
    %434 = vmatprep.subr.mxu0 0.0
    %435 = vmatpush2.msra.mxu0 0.0
    %436 = vmatprep.mubr.f32.mxu0 0.0
    %437 = vmatmul.mubr.f32.gmra.mxu0 %v370
    %v438 = vpop.f32.mrf.mxu0
    %v439 = vadd.f32 0.0, %v438
    %v440 = vpop.f32.mrf.mxu0
    %441 = vdwg.mxu0
    %v442 = vadd.f32 %v297, %v439
    %v443 = vtanh.pop %v442
    %s444 = scalar_lea.vmem [#allocation12], 8
    %445 = vst [vmem:[%s444] sm:$0xff] %v443
    %446 = vmatprep.subr.mxu0 0.0
    %447 = vmatpush1.msra.mxu0 %v296
    %448 = vmatprep.subr.mxu0 0.0
    %449 = vmatpush1.msra.mxu0 %v295
    %450 = vmatprep.subr.mxu0 0.0
    %451 = vmatpush1.msra.mxu0 %v294
    %452 = vmatprep.subr.mxu0 0.0
    %453 = vmatpush1.msra.mxu0 %v293
    %454 = vmatprep.subr.mxu0 0.0
    %455 = vmatpush1.msra.mxu0 %v292
    %456 = vmatprep.subr.mxu0 0.0
    %457 = vmatpush1.msra.mxu0 %v291
    %458 = vmatprep.subr.mxu0 0.0
    %459 = vmatpush1.msra.mxu0 %v290
    %460 = vmatprep.subr.mxu0 0.0
    %461 = vmatpush1.msra.mxu0 %v289
    %462 = vmatprep.subr.mxu0 0.0
    %463 = vmatpush1.msra.mxu0 %v288
    %464 = vmatprep.subr.mxu0 0.0
    %465 = vmatpush1.msra.mxu0 %v287
    %466 = vmatprep.subr.mxu0 0.0
    %467 = vmatpush1.msra.mxu0 %v286
    %468 = vmatprep.subr.mxu0 0.0
    %469 = vmatpush1.msra.mxu0 %v285
    %470 = vmatprep.subr.mxu0 0.0
    %471 = vmatpush1.msra.mxu0 %v284
    %472 = vmatprep.subr.mxu0 0.0
    %473 = vmatpush1.msra.mxu0 %v283
    %474 = vmatprep.subr.mxu0 0.0
    %475 = vmatpush1.msra.mxu0 %v282
    %476 = vmatprep.subr.mxu0 0.0
    %477 = vmatpush1.msra.mxu0 %v281
    %478 = vmatprep.subr.mxu0 0.0
    %479 = vmatpush2.msra.mxu0 0.0
    %480 = vmatprep.subr.mxu0 0.0
    %481 = vmatpush2.msra.mxu0 0.0
    %482 = vmatprep.subr.mxu0 0.0
    %483 = vmatpush2.msra.mxu0 0.0
    %484 = vmatprep.subr.mxu0 0.0
    %485 = vmatpush2.msra.mxu0 0.0
    %486 = vmatprep.subr.mxu0 0.0
    %487 = vmatpush2.msra.mxu0 0.0
    %488 = vmatprep.subr.mxu0 0.0
    %489 = vmatpush2.msra.mxu0 0.0
    %490 = vmatprep.subr.mxu0 0.0
    %491 = vmatpush2.msra.mxu0 0.0
    %492 = vmatprep.subr.mxu0 0.0
    %493 = vmatpush2.msra.mxu0 0.0
    %494 = vmatprep.subr.mxu0 0.0
    %495 = vmatpush2.msra.mxu0 0.0
    %496 = vmatprep.subr.mxu0 0.0
    %497 = vmatpush2.msra.mxu0 0.0
    %498 = vmatprep.subr.mxu0 0.0
    %499 = vmatpush2.msra.mxu0 0.0
    %500 = vmatprep.subr.mxu0 0.0
    %501 = vmatpush2.msra.mxu0 0.0
    %502 = vmatprep.subr.mxu0 0.0
    %503 = vmatpush2.msra.mxu0 0.0
    %504 = vmatprep.subr.mxu0 0.0
    %505 = vmatpush2.msra.mxu0 0.0
    %506 = vmatprep.subr.mxu0 0.0
    %507 = vmatpush2.msra.mxu0 0.0
    %508 = vmatprep.subr.mxu0 0.0
    %509 = vmatpush2.msra.mxu0 0.0
    %510 = vmatprep.mubr.f32.mxu0 0.0
    %511 = vmatmul.mubr.f32.gmra.mxu0 %v443
    %v512 = vpop.f32.mrf.mxu0
    %v513 = vadd.f32 0.0, %v512
    %v514 = vpop.f32.mrf.mxu0
    %515 = vdwg.mxu0
    %v516 = vadd.f32 %v297, %v513
    %v517 = vtanh.pop %v516
    %s518 = scalar_lea.vmem [#allocation12], 16
    %519 = vst [vmem:[%s518] sm:$0xff] %v517
    %520 = vmatprep.subr.mxu0 0.0
    %521 = vmatpush1.msra.mxu0 %v296
    %522 = vmatprep.subr.mxu0 0.0
    %523 = vmatpush1.msra.mxu0 %v295
    %524 = vmatprep.subr.mxu0 0.0
    %525 = vmatpush1.msra.mxu0 %v294
    %526 = vmatprep.subr.mxu0 0.0
    %527 = vmatpush1.msra.mxu0 %v293
    %528 = vmatprep.subr.mxu0 0.0
    %529 = vmatpush1.msra.mxu0 %v292
    %530 = vmatprep.subr.mxu0 0.0
    %531 = vmatpush1.msra.mxu0 %v291
    %532 = vmatprep.subr.mxu0 0.0
    %533 = vmatpush1.msra.mxu0 %v290
    %534 = vmatprep.subr.mxu0 0.0
    %535 = vmatpush1.msra.mxu0 %v289
    %536 = vmatprep.subr.mxu0 0.0
    %537 = vmatpush1.msra.mxu0 %v288
    %538 = vmatprep.subr.mxu0 0.0
    %539 = vmatpush1.msra.mxu0 %v287
    %540 = vmatprep.subr.mxu0 0.0
    %541 = vmatpush1.msra.mxu0 %v286
    %542 = vmatprep.subr.mxu0 0.0
    %543 = vmatpush1.msra.mxu0 %v285
    %544 = vmatprep.subr.mxu0 0.0
    %545 = vmatpush1.msra.mxu0 %v284
    %546 = vmatprep.subr.mxu0 0.0
    %547 = vmatpush1.msra.mxu0 %v283
    %548 = vmatprep.subr.mxu0 0.0
    %549 = vmatpush1.msra.mxu0 %v282
    %550 = vmatprep.subr.mxu0 0.0
    %551 = vmatpush1.msra.mxu0 %v281
    %552 = vmatprep.subr.mxu0 0.0
    %553 = vmatpush2.msra.mxu0 0.0
    %554 = vmatprep.subr.mxu0 0.0
    %555 = vmatpush2.msra.mxu0 0.0
    %556 = vmatprep.subr.mxu0 0.0
    %557 = vmatpush2.msra.mxu0 0.0
    %558 = vmatprep.subr.mxu0 0.0
    %559 = vmatpush2.msra.mxu0 0.0
    %560 = vmatprep.subr.mxu0 0.0
    %561 = vmatpush2.msra.mxu0 0.0
    %562 = vmatprep.subr.mxu0 0.0
    %563 = vmatpush2.msra.mxu0 0.0
    %564 = vmatprep.subr.mxu0 0.0
    %565 = vmatpush2.msra.mxu0 0.0
    %566 = vmatprep.subr.mxu0 0.0
    %567 = vmatpush2.msra.mxu0 0.0
    %568 = vmatprep.subr.mxu0 0.0
    %569 = vmatpush2.msra.mxu0 0.0
    %570 = vmatprep.subr.mxu0 0.0
    %571 = vmatpush2.msra.mxu0 0.0
    %572 = vmatprep.subr.mxu0 0.0
    %573 = vmatpush2.msra.mxu0 0.0
    %574 = vmatprep.subr.mxu0 0.0
    %575 = vmatpush2.msra.mxu0 0.0
    %576 = vmatprep.subr.mxu0 0.0
    %577 = vmatpush2.msra.mxu0 0.0
    %578 = vmatprep.subr.mxu0 0.0
    %579 = vmatpush2.msra.mxu0 0.0
    %580 = vmatprep.subr.mxu0 0.0
    %581 = vmatpush2.msra.mxu0 0.0
    %582 = vmatprep.subr.mxu0 0.0
    %583 = vmatpush2.msra.mxu0 0.0
    %584 = vmatprep.mubr.f32.mxu0 0.0
    %585 = vmatmul.mubr.f32.gmra.mxu0 %v517
    %v586 = vpop.f32.mrf.mxu0
    %v587 = vadd.f32 0.0, %v586
    %v588 = vpop.f32.mrf.mxu0
    %589 = vdwg.mxu0
    %v590 = vadd.f32 %v297, %v587
    %v591 = vtanh.pop %v590
    %s592 = scalar_lea.vmem [#allocation12], 24
    %593 = vst [vmem:[%s592] sm:$0xff] %v591
    %594 = vmatprep.subr.mxu0 0.0
    %595 = vmatpush1.msra.mxu0 %v296
    %596 = vmatprep.subr.mxu0 0.0
    %597 = vmatpush1.msra.mxu0 %v295
    %598 = vmatprep.subr.mxu0 0.0
    %599 = vmatpush1.msra.mxu0 %v294
    %600 = vmatprep.subr.mxu0 0.0
    %601 = vmatpush1.msra.mxu0 %v293
    %602 = vmatprep.subr.mxu0 0.0
    %603 = vmatpush1.msra.mxu0 %v292
    %604 = vmatprep.subr.mxu0 0.0
    %605 = vmatpush1.msra.mxu0 %v291
    %606 = vmatprep.subr.mxu0 0.0
    %607 = vmatpush1.msra.mxu0 %v290
    %608 = vmatprep.subr.mxu0 0.0
    %609 = vmatpush1.msra.mxu0 %v289
    %610 = vmatprep.subr.mxu0 0.0
    %611 = vmatpush1.msra.mxu0 %v288
    %612 = vmatprep.subr.mxu0 0.0
    %613 = vmatpush1.msra.mxu0 %v287
    %614 = vmatprep.subr.mxu0 0.0
    %615 = vmatpush1.msra.mxu0 %v286
    %616 = vmatprep.subr.mxu0 0.0
    %617 = vmatpush1.msra.mxu0 %v285
    %618 = vmatprep.subr.mxu0 0.0
    %619 = vmatpush1.msra.mxu0 %v284
    %620 = vmatprep.subr.mxu0 0.0
    %621 = vmatpush1.msra.mxu0 %v283
    %622 = vmatprep.subr.mxu0 0.0
    %623 = vmatpush1.msra.mxu0 %v282
    %624 = vmatprep.subr.mxu0 0.0
    %625 = vmatpush1.msra.mxu0 %v281
    %626 = vmatprep.subr.mxu0 0.0
    %627 = vmatpush2.msra.mxu0 0.0
    %628 = vmatprep.subr.mxu0 0.0
    %629 = vmatpush2.msra.mxu0 0.0
    %630 = vmatprep.subr.mxu0 0.0
    %631 = vmatpush2.msra.mxu0 0.0
    %632 = vmatprep.subr.mxu0 0.0
    %633 = vmatpush2.msra.mxu0 0.0
    %634 = vmatprep.subr.mxu0 0.0
    %635 = vmatpush2.msra.mxu0 0.0
    %636 = vmatprep.subr.mxu0 0.0
    %637 = vmatpush2.msra.mxu0 0.0
    %638 = vmatprep.subr.mxu0 0.0
    %639 = vmatpush2.msra.mxu0 0.0
    %640 = vmatprep.subr.mxu0 0.0
    %641 = vmatpush2.msra.mxu0 0.0
    %642 = vmatprep.subr.mxu0 0.0
    %643 = vmatpush2.msra.mxu0 0.0
    %644 = vmatprep.subr.mxu0 0.0
    %645 = vmatpush2.msra.mxu0 0.0
    %646 = vmatprep.subr.mxu0 0.0
    %647 = vmatpush2.msra.mxu0 0.0
    %648 = vmatprep.subr.mxu0 0.0
    %649 = vmatpush2.msra.mxu0 0.0
    %650 = vmatprep.subr.mxu0 0.0
    %651 = vmatpush2.msra.mxu0 0.0
    %652 = vmatprep.subr.mxu0 0.0
    %653 = vmatpush2.msra.mxu0 0.0
    %654 = vmatprep.subr.mxu0 0.0
    %655 = vmatpush2.msra.mxu0 0.0
    %656 = vmatprep.subr.mxu0 0.0
    %657 = vmatpush2.msra.mxu0 0.0
    %658 = vmatprep.mubr.f32.mxu0 0.0
    %659 = vmatmul.mubr.f32.gmra.mxu0 %v591
    %v660 = vpop.f32.mrf.mxu0
    %v661 = vadd.f32 0.0, %v660
    %v662 = vpop.f32.mrf.mxu0
    %663 = vdwg.mxu0
    %v664 = vadd.f32 %v297, %v661
    %v665 = vtanh.pop %v664
    %s666 = scalar_lea.vmem [#allocation12], 32
    %667 = vst [vmem:[%s666] sm:$0xff] %v665
    %668 = vmatprep.subr.mxu0 0.0
    %669 = vmatpush1.msra.mxu0 %v296
    %670 = vmatprep.subr.mxu0 0.0
    %671 = vmatpush1.msra.mxu0 %v295
    %672 = vmatprep.subr.mxu0 0.0
    %673 = vmatpush1.msra.mxu0 %v294
    %674 = vmatprep.subr.mxu0 0.0
    %675 = vmatpush1.msra.mxu0 %v293
    %676 = vmatprep.subr.mxu0 0.0
    %677 = vmatpush1.msra.mxu0 %v292
    %678 = vmatprep.subr.mxu0 0.0
    %679 = vmatpush1.msra.mxu0 %v291
    %680 = vmatprep.subr.mxu0 0.0
    %681 = vmatpush1.msra.mxu0 %v290
    %682 = vmatprep.subr.mxu0 0.0
    %683 = vmatpush1.msra.mxu0 %v289
    %684 = vmatprep.subr.mxu0 0.0
    %685 = vmatpush1.msra.mxu0 %v288
    %686 = vmatprep.subr.mxu0 0.0
    %687 = vmatpush1.msra.mxu0 %v287
    %688 = vmatprep.subr.mxu0 0.0
    %689 = vmatpush1.msra.mxu0 %v286
    %690 = vmatprep.subr.mxu0 0.0
    %691 = vmatpush1.msra.mxu0 %v285
    %692 = vmatprep.subr.mxu0 0.0
    %693 = vmatpush1.msra.mxu0 %v284
    %694 = vmatprep.subr.mxu0 0.0
    %695 = vmatpush1.msra.mxu0 %v283
    %696 = vmatprep.subr.mxu0 0.0
    %697 = vmatpush1.msra.mxu0 %v282
    %698 = vmatprep.subr.mxu0 0.0
    %699 = vmatpush1.msra.mxu0 %v281
    %700 = vmatprep.subr.mxu0 0.0
    %701 = vmatpush2.msra.mxu0 0.0
    %702 = vmatprep.subr.mxu0 0.0
    %703 = vmatpush2.msra.mxu0 0.0
    %704 = vmatprep.subr.mxu0 0.0
    %705 = vmatpush2.msra.mxu0 0.0
    %706 = vmatprep.subr.mxu0 0.0
    %707 = vmatpush2.msra.mxu0 0.0
    %708 = vmatprep.subr.mxu0 0.0
    %709 = vmatpush2.msra.mxu0 0.0
    %710 = vmatprep.subr.mxu0 0.0
    %711 = vmatpush2.msra.mxu0 0.0
    %712 = vmatprep.subr.mxu0 0.0
    %713 = vmatpush2.msra.mxu0 0.0
    %714 = vmatprep.subr.mxu0 0.0
    %715 = vmatpush2.msra.mxu0 0.0
    %716 = vmatprep.subr.mxu0 0.0
    %717 = vmatpush2.msra.mxu0 0.0
    %718 = vmatprep.subr.mxu0 0.0
    %719 = vmatpush2.msra.mxu0 0.0
    %720 = vmatprep.subr.mxu0 0.0
    %721 = vmatpush2.msra.mxu0 0.0
    %722 = vmatprep.subr.mxu0 0.0
    %723 = vmatpush2.msra.mxu0 0.0
    %724 = vmatprep.subr.mxu0 0.0
    %725 = vmatpush2.msra.mxu0 0.0
    %726 = vmatprep.subr.mxu0 0.0
    %727 = vmatpush2.msra.mxu0 0.0
    %728 = vmatprep.subr.mxu0 0.0
    %729 = vmatpush2.msra.mxu0 0.0
    %730 = vmatprep.subr.mxu0 0.0
    %731 = vmatpush2.msra.mxu0 0.0
    %732 = vmatprep.mubr.f32.mxu0 0.0
    %733 = vmatmul.mubr.f32.gmra.mxu0 %v665
    %v734 = vpop.f32.mrf.mxu0
    %v735 = vadd.f32 0.0, %v734
    %v736 = vpop.f32.mrf.mxu0
    %737 = vdwg.mxu0
    %v738 = vadd.f32 %v297, %v735
    %v739 = vtanh.pop %v738
    %s740 = scalar_lea.vmem [#allocation12], 40
    %741 = vst [vmem:[%s740] sm:$0xff] %v739
    %742 = vmatprep.subr.mxu0 0.0
    %743 = vmatpush1.msra.mxu0 %v296
    %744 = vmatprep.subr.mxu0 0.0
    %745 = vmatpush1.msra.mxu0 %v295
    %746 = vmatprep.subr.mxu0 0.0
    %747 = vmatpush1.msra.mxu0 %v294
    %748 = vmatprep.subr.mxu0 0.0
    %749 = vmatpush1.msra.mxu0 %v293
    %750 = vmatprep.subr.mxu0 0.0
    %751 = vmatpush1.msra.mxu0 %v292
    %752 = vmatprep.subr.mxu0 0.0
    %753 = vmatpush1.msra.mxu0 %v291
    %754 = vmatprep.subr.mxu0 0.0
    %755 = vmatpush1.msra.mxu0 %v290
    %756 = vmatprep.subr.mxu0 0.0
    %757 = vmatpush1.msra.mxu0 %v289
    %758 = vmatprep.subr.mxu0 0.0
    %759 = vmatpush1.msra.mxu0 %v288
    %760 = vmatprep.subr.mxu0 0.0
    %761 = vmatpush1.msra.mxu0 %v287
    %762 = vmatprep.subr.mxu0 0.0
    %763 = vmatpush1.msra.mxu0 %v286
    %764 = vmatprep.subr.mxu0 0.0
    %765 = vmatpush1.msra.mxu0 %v285
    %766 = vmatprep.subr.mxu0 0.0
    %767 = vmatpush1.msra.mxu0 %v284
    %768 = vmatprep.subr.mxu0 0.0
    %769 = vmatpush1.msra.mxu0 %v283
    %770 = vmatprep.subr.mxu0 0.0
    %771 = vmatpush1.msra.mxu0 %v282
    %772 = vmatprep.subr.mxu0 0.0
    %773 = vmatpush1.msra.mxu0 %v281
    %774 = vmatprep.subr.mxu0 0.0
    %775 = vmatpush2.msra.mxu0 0.0
    %776 = vmatprep.subr.mxu0 0.0
    %777 = vmatpush2.msra.mxu0 0.0
    %778 = vmatprep.subr.mxu0 0.0
    %779 = vmatpush2.msra.mxu0 0.0
    %780 = vmatprep.subr.mxu0 0.0
    %781 = vmatpush2.msra.mxu0 0.0
    %782 = vmatprep.subr.mxu0 0.0
    %783 = vmatpush2.msra.mxu0 0.0
    %784 = vmatprep.subr.mxu0 0.0
    %785 = vmatpush2.msra.mxu0 0.0
    %786 = vmatprep.subr.mxu0 0.0
    %787 = vmatpush2.msra.mxu0 0.0
    %788 = vmatprep.subr.mxu0 0.0
    %789 = vmatpush2.msra.mxu0 0.0
    %790 = vmatprep.subr.mxu0 0.0
    %791 = vmatpush2.msra.mxu0 0.0
    %792 = vmatprep.subr.mxu0 0.0
    %793 = vmatpush2.msra.mxu0 0.0
    %794 = vmatprep.subr.mxu0 0.0
    %795 = vmatpush2.msra.mxu0 0.0
    %796 = vmatprep.subr.mxu0 0.0
    %797 = vmatpush2.msra.mxu0 0.0
    %798 = vmatprep.subr.mxu0 0.0
    %799 = vmatpush2.msra.mxu0 0.0
    %800 = vmatprep.subr.mxu0 0.0
    %801 = vmatpush2.msra.mxu0 0.0
    %802 = vmatprep.subr.mxu0 0.0
    %803 = vmatpush2.msra.mxu0 0.0
    %804 = vmatprep.subr.mxu0 0.0
    %805 = vmatpush2.msra.mxu0 0.0
    %806 = vmatprep.mubr.f32.mxu0 0.0
    %807 = vmatmul.mubr.f32.gmra.mxu0 %v739
    %v808 = vpop.f32.mrf.mxu0
    %v809 = vadd.f32 0.0, %v808
    %v810 = vpop.f32.mrf.mxu0
    %811 = vdwg.mxu0
    %v812 = vadd.f32 %v297, %v809
    %v813 = vtanh.pop %v812
    %s814 = scalar_lea.vmem [#allocation12], 48
    %815 = vst [vmem:[%s814] sm:$0xff] %v813
    %816 = vmatprep.subr.mxu0 0.0
    %817 = vmatpush1.msra.mxu0 %v296
    %818 = vmatprep.subr.mxu0 0.0
    %819 = vmatpush1.msra.mxu0 %v295
    %820 = vmatprep.subr.mxu0 0.0
    %821 = vmatpush1.msra.mxu0 %v294
    %822 = vmatprep.subr.mxu0 0.0
    %823 = vmatpush1.msra.mxu0 %v293
    %824 = vmatprep.subr.mxu0 0.0
    %825 = vmatpush1.msra.mxu0 %v292
    %826 = vmatprep.subr.mxu0 0.0
    %827 = vmatpush1.msra.mxu0 %v291
    %828 = vmatprep.subr.mxu0 0.0
    %829 = vmatpush1.msra.mxu0 %v290
    %830 = vmatprep.subr.mxu0 0.0
    %831 = vmatpush1.msra.mxu0 %v289
    %832 = vmatprep.subr.mxu0 0.0
    %833 = vmatpush1.msra.mxu0 %v288
    %834 = vmatprep.subr.mxu0 0.0
    %835 = vmatpush1.msra.mxu0 %v287
    %836 = vmatprep.subr.mxu0 0.0
    %837 = vmatpush1.msra.mxu0 %v286
    %838 = vmatprep.subr.mxu0 0.0
    %839 = vmatpush1.msra.mxu0 %v285
    %840 = vmatprep.subr.mxu0 0.0
    %841 = vmatpush1.msra.mxu0 %v284
    %842 = vmatprep.subr.mxu0 0.0
    %843 = vmatpush1.msra.mxu0 %v283
    %844 = vmatprep.subr.mxu0 0.0
    %845 = vmatpush1.msra.mxu0 %v282
    %846 = vmatprep.subr.mxu0 0.0
    %847 = vmatpush1.msra.mxu0 %v281
    %848 = vmatprep.subr.mxu0 0.0
    %849 = vmatpush2.msra.mxu0 0.0
    %850 = vmatprep.subr.mxu0 0.0
    %851 = vmatpush2.msra.mxu0 0.0
    %852 = vmatprep.subr.mxu0 0.0
    %853 = vmatpush2.msra.mxu0 0.0
    %854 = vmatprep.subr.mxu0 0.0
    %855 = vmatpush2.msra.mxu0 0.0
    %856 = vmatprep.subr.mxu0 0.0
    %857 = vmatpush2.msra.mxu0 0.0
    %858 = vmatprep.subr.mxu0 0.0
    %859 = vmatpush2.msra.mxu0 0.0
    %860 = vmatprep.subr.mxu0 0.0
    %861 = vmatpush2.msra.mxu0 0.0
    %862 = vmatprep.subr.mxu0 0.0
    %863 = vmatpush2.msra.mxu0 0.0
    %864 = vmatprep.subr.mxu0 0.0
    %865 = vmatpush2.msra.mxu0 0.0
    %866 = vmatprep.subr.mxu0 0.0
    %867 = vmatpush2.msra.mxu0 0.0
    %868 = vmatprep.subr.mxu0 0.0
    %869 = vmatpush2.msra.mxu0 0.0
    %870 = vmatprep.subr.mxu0 0.0
    %871 = vmatpush2.msra.mxu0 0.0
    %872 = vmatprep.subr.mxu0 0.0
    %873 = vmatpush2.msra.mxu0 0.0
    %874 = vmatprep.subr.mxu0 0.0
    %875 = vmatpush2.msra.mxu0 0.0
    %876 = vmatprep.subr.mxu0 0.0
    %877 = vmatpush2.msra.mxu0 0.0
    %878 = vmatprep.subr.mxu0 0.0
    %879 = vmatpush2.msra.mxu0 0.0
    %880 = vmatprep.mubr.f32.mxu0 0.0
    %881 = vmatmul.mubr.f32.gmra.mxu0 %v813
    %v882 = vpop.f32.mrf.mxu0
    %v883 = vadd.f32 0.0, %v882
    %v884 = vpop.f32.mrf.mxu0
    %885 = vdwg.mxu0
    %v886 = vadd.f32 %v297, %v883
    %v887 = vtanh.pop %v886
    %s888 = scalar_lea.vmem [#allocation12], 56
    %889 = vst [vmem:[%s888] sm:$0xff] %v887
    %890 = vst [vmem:[#allocation2] sm:$0xff] %v887
    // Predicated region
    $region50: #{tpu_custom_call.1} parent=1 // pred_check
      _
    $region51: #{tpu_custom_call.1} parent=1 // pred_check_branch
      %892 = sbr.rel (0) target = $region53
    $region52: #{tpu_custom_call.1} parent=1 // pred_region
      %s894 = ssub.s32 1024, 1024
      %895 = vsyncadd [#allocation6], %s894
      %s896 = sshll.u32 [#allocation12], 4
      %s897 = int_to_ptr.vmem [resolvable:$true] %s896
      %902 = dma.vmem_to_hbm [thread:$0]  %s897, 1024, %s7, [#allocation6], 128, 128, 8
    $region53: #{tpu_custom_call.1} parent=1 // pred_fallthru
      _
    // Predicated region
    $region54: #{tpu_custom_call.1} parent=1 // pred_check
      _
    $region55: #{tpu_custom_call.1} parent=1 // pred_check_branch
      %904 = sbr.rel (0) target = $region57
    $region56: #{tpu_custom_call.1} parent=1 // pred_region
      %905 = dma.done [#allocation6], 1024
    $region57: #{tpu_custom_call.1} parent=1 // pred_fallthru
      _
    %906 = vsyncpa [#allocation5], 1
    %907 = vsyncpa [#allocation8], 1
    %908 = vsyncpa [#allocation11], 1
    %909 = vsyncpa [#allocation6], 1

</llo_original>
